<compile_context>
chip_gen: v6e
topology: v6e:2x2x1
jax: 0.10.0
libtpu: 0.0.40
codegen_flags: <defaults>
</compile_context>

<pallas_src>
import functools

import jax
import jax.numpy as jnp
import numpy as np
from jax.experimental import pallas as pl
from jax.experimental.pallas import tpu as pltpu


def _log_sigmoid(x):
    # numerically stable log(sigmoid(x)) == torch.nn.LogSigmoid
    return jnp.minimum(x, 0.0) - jnp.log(1.0 + jnp.exp(-jnp.abs(x)))


# ------------------------- host-side constant matrices -------------------------
def _np_chunk_sum(d, chunks):
    # (chunks*d, chunks): column k sums the k-th contiguous d-lane chunk.
    m = np.zeros((chunks * d, chunks), np.float32)
    for k in range(chunks):
        m[k * d:(k + 1) * d, k] = 1.0
    return m


def _np_stride_sum(period, reps):
    # (reps*period, period): column a sums rows r with r % period == a.
    m = np.zeros((reps * period, period), np.float32)
    for r in range(reps * period):
        m[r, r % period] = 1.0
    return m


def _vmem_limit_bytes(*block_shapes):
    # double-buffered input/output blocks + headroom, capped for v7x (64 MiB phys)
    b = sum(int(np.prod(s)) * 4 for s in block_shapes)
    return int(min(max(2 * b + (16 << 20), 32 << 20), 48 << 20))


# --------------------------- skip-gram loss kernel ----------------------------
def _sg_loss_kernel(ct_ref, pool_ref, gather_ref, ctx_ref, neg_ref,
                    sum_a_ref, sum_an_ref, sum_negs_ref, out_ref, pooled_acc,
                    *, num_aspects, dim, num_negs, inv_total):
    # ct_ref:     (TB, A*D)       centers pre-tiled lane-dense (A replicas)
    # pool_ref:   (TB, TL)        normalized bag-assignment chunk (mean pooling)
    # gather_ref: (TL, A*D)       aspect embeddings at `lists` chunk, aspects on lanes
    # ctx_ref:    (TB, A*D)       aspect embeddings of positive contexts
    # neg_ref:    (TB, NN*A*D)    aspect embeddings of negatives
    # sum_*_ref:  constant chunk-/stride-sum matrices (loaded once)
    # out_ref:    (1, 8, 128)     lane-dense per-tile partial loss
    # pooled_acc: (TB, A*D)       VMEM accumulator over the blocked bag axis
    A, D, NN = num_aspects, dim, num_negs
    f32 = jnp.float32
    kL = pl.program_id(1)

    @pl.when(kL == 0)
    def _():
        pooled_acc[...] = jnp.zeros_like(pooled_acc)

    # F.embedding_bag(mode='mean') for all aspects at once: lane-dense MXU matmul,
    # accumulated over the blocked bag (Lp) axis.
    pooled_acc[...] += jnp.dot(pool_ref[...], gather_ref[...],
                               preferred_element_type=f32)

    @pl.when(kL == pl.num_programs(1) - 1)
    def _():
        ct = ct_ref[...]                                      # (TB, A*D)
        ctx = ctx_ref[...]                                    # (TB, A*D)
        neg = neg_ref[...]                                    # (TB, NN*A*D)
        pooled = pooled_acc[...]                              # (TB, A*D)
        TB = ct.shape[0]

        sum_a = sum_a_ref[...]                                # (A*D, A)
        sum_an = sum_an_ref[...]                              # (NN*A*D, NN*A)
        sum_negs = sum_negs_ref[...]                          # (NN*A, A)

        # fused chunk-sum: aspect scores and positive scores in one MXU pass
        stacked = jnp.concatenate([pooled * ct, ctx * ct], axis=0)    # (2*TB, A*D)
        red = jnp.dot(stacked, sum_a, preferred_element_type=f32)     # (2*TB, A)
        asp_score = red[:TB]                                          # (TB, A)
        sp = red[TB:]                                                 # (TB, A)

        # negatives: lane-replicate center slab (layout copy, no K=32 matmul)
        ctn = jnp.concatenate([ct] * NN, axis=-1)                     # (TB, NN*A*D)
        sn = jnp.dot(neg * ctn, sum_an, preferred_element_type=f32)   # (TB, NN*A)

        score_pos = -_log_sigmoid(sp)                                 # (TB, A)
        score_neg = jnp.dot(-_log_sigmoid(-sn), sum_negs,
                            preferred_element_type=f32)               # (TB, A)

        # softmax over aspects (isNormalSoftmax); EUP approx recip + Newton step
        m = jnp.max(asp_score, axis=-1, keepdims=True)
        e = jnp.exp(asp_score - m)
        s = jnp.sum(e, axis=-1, keepdims=True)
        r = pl.reciprocal(s, approx=True)
        r = r * (2.0 - s * r)                      # one Newton step -> full f32
        w = e * r

        tile_sum = jnp.sum(w * (score_pos + score_neg)) * inv_total
        out_ref[...] = jnp.full(out_ref.shape, tile_sum, f32)


# ------------------------- diversity regularizer kernel ------------------------
def _div_reg_kernel(emb_ref, sum_a_ref, out_ref, *, num_aspects, dim,
                    threshold, eps):
    # emb_ref:   (TN, A*D)   node-major tile, aspects packed on lanes
    # sum_a_ref: (A*D, A)    constant chunk-sum matrix
    # out_ref:   (1, 8, 128) lane-dense per-tile partial div_metric
    A, D = num_aspects, dim
    f32 = jnp.float32
    x = emb_ref[...].astype(f32)
    sum_a = sum_a_ref[...]
    TN = x.shape[0]

    # lane-dense pair products via XLU rolls; ONE stacked MXU chunk-sum matmul.
    slabs = [x * x]                              # squared norms source
    shifts = list(range(1, A // 2 + 1))
    for s in shifts:
        r = pltpu.roll(x, s * D, axis=1)
        slabs.append(x * r)                      # pair dots:   chunk a ~ (a, a-s)
        slabs.append(r * r)                      # rolled norms: chunk a ~ (a-s)
    red = jnp.dot(jnp.concatenate(slabs, axis=0), sum_a,
                  preferred_element_type=f32)    # ((1+2K)*TN, A)

    n = jnp.sqrt(red[:TN])                       # (TN, A) per-aspect norms
    acc = jnp.zeros((), f32)
    for idx, s in enumerate(shifts):
        d = red[(1 + 2 * idx) * TN:(2 + 2 * idx) * TN]            # pairwise dots
        nr = jnp.sqrt(red[(2 + 2 * idx) * TN:(3 + 2 * idx) * TN])  # rolled norms
        # F.cosine_similarity semantics: clamp the norm PRODUCT with eps
        sim = d / jnp.maximum(n * nr, eps)
        a = jnp.abs(sim)
        contrib = jnp.sum(jnp.where(a > threshold, a, 0.0))
        # at shift A/2 (even A) every unordered pair appears exactly twice
        weight = 0.5 if (A % 2 == 0 and s == A // 2) else 1.0
        acc = acc + weight * contrib

    out_ref[...] = jnp.full(out_ref.shape, acc, f32)


# ----------------------------------- wrapper -----------------------------------
def asp2vec_forward(params, pairs, negs, offsets, lists, cfg):
    A, N, D = cfg["num_aspects"], cfg["num_nodes"], cfg["dim"]
    assert cfg["pooling"] == "mean" and cfg["isSoftmax"] and cfg["isNormalSoftmax"]
    aspect_r = params["aspect"].reshape(A, N, D)   # weight[k*N + n] == aspect_r[k, n]
    center_w = params["center"]

    B = pairs.shape[0]
    NN = negs.shape[1]
    L = lists.shape[0]

    # block the bag axis so the (TB, Lp) pool block stays bounded on v7x VMEM
    Lp0 = ((L + 127) // 128) * 128
    TL = Lp0 if Lp0 <= 512 else 512
    Lp = ((Lp0 + TL - 1) // TL) * TL
    KL = Lp // TL

    centers = pairs[:, 0]
    contexts = pairs[:, 1]

    # ---- glue: gathers + mean-pooling matrix for embedding_bag (ragged) -------
    # TODO(synk): for production sizes, gather the rows in-kernel (scalar-prefetched
    # offsets/lists + manual DMA from an aspect table kept in pl.ANY) instead of
    # materializing pool/gathered/ctx/neg in HBM.
    embed_centers = center_w[centers].astype(jnp.float32)              # (B, D)
    ct_tiled = jnp.tile(embed_centers, (1, A))                         # (B, A*D)

    lists_p = jnp.zeros((Lp,), lists.dtype).at[:L].set(lists)
    t_idx = jnp.arange(Lp)
    seg = jnp.sum(t_idx[:, None] >= offsets[None, :], axis=1) - 1      # bag id per pos
    counts = jnp.concatenate([offsets[1:],
                              jnp.array([L], dtype=offsets.dtype)]) - offsets
    valid = (t_idx < L)
    pool = ((seg[None, :] == jnp.arange(B)[:, None]) & valid[None, :]).astype(jnp.float32)
    pool = pool / jnp.maximum(counts, 1).astype(jnp.float32)[:, None]  # (B, Lp)

    # lane-dense packings: aspects (and negatives) packed along the 128-lane axis
    # (padded rows beyond L read node 0 but are zeroed by the pool weights)
    gathered = jnp.transpose(aspect_r[:, lists_p, :], (1, 0, 2)).reshape(Lp, A * D)
    ctx_emb = jnp.transpose(aspect_r[:, contexts, :], (1, 0, 2)).reshape(B, A * D)
    neg_emb = jnp.transpose(aspect_r[:, negs, :], (1, 2, 0, 3)).reshape(B, NN * A * D)

    # constant chunk-/stride-sum matrices (hoisted out of the kernels, DMA'd once)
    sum_a = jnp.asarray(_np_chunk_sum(D, A))                           # (A*D, A)
    sum_an = jnp.asarray(_np_chunk_sum(D, NN * A))                     # (NN*A*D, NN*A)
    sum_negs = jnp.asarray(_np_stride_sum(A, NN))                      # (NN*A, A)

    # ---- Pallas: skip-gram loss ------------------------------------------------
    TB = min(cfg.get("tb", 256), B)
    assert B % TB == 0
    G = B // TB
    loss_kernel = functools.partial(_sg_loss_kernel, num_aspects=A, dim=D,
                                    num_negs=NN, inv_total=1.0 / float(B * A))
    sg_blocks = [(TB, A * D), (TB, TL), (TL, A * D), (TB, A * D),
                 (TB, NN * A * D), (A * D, A), (NN * A * D, NN * A),
                 (NN * A, A), (8, 128), (TB, A * D)]
    sg_partials = pl.pallas_call(
        loss_kernel,
        out_shape=jax.ShapeDtypeStruct((G, 8, 128), jnp.float32),
        grid_spec=pltpu.PrefetchScalarGridSpec(
            num_scalar_prefetch=0,
            grid=(G, KL),
            in_specs=[
                pl.BlockSpec((TB, A * D), lambda i, k: (i, 0)),          # centers
                pl.BlockSpec((TB, TL), lambda i, k: (i, k)),             # pool chunk
                pl.BlockSpec((TL, A * D), lambda i, k: (k, 0)),          # gathered chunk
                pl.BlockSpec((TB, A * D), lambda i, k: (i, 0)),          # contexts
                pl.BlockSpec((TB, NN * A * D), lambda i, k: (i, 0)),     # negatives
                pl.BlockSpec((A * D, A), lambda i, k: (0, 0)),           # sum_a
                pl.BlockSpec((NN * A * D, NN * A), lambda i, k: (0, 0)), # sum_an
                pl.BlockSpec((NN * A, A), lambda i, k: (0, 0)),          # sum_negs
            ],
            out_specs=pl.BlockSpec((1, 8, 128), lambda i, k: (i, 0, 0)),
            scratch_shapes=[pltpu.VMEM((TB, A * D), jnp.float32)],
        ),
        compiler_params=pltpu.CompilerParams(
            # TODO(synk): on v7x mark the batch axis pltpu.CORE_PARALLEL (with the
            # grid a multiple of 2) to shard tiles across both TensorCores.
            dimension_semantics=("parallel", "arbitrary"),
            vmem_limit_bytes=_vmem_limit_bytes(*sg_blocks)),
    )(ct_tiled, pool, gathered, ctx_emb, neg_emb, sum_a, sum_an, sum_negs)
    sg_loss = jnp.sum(sg_partials[:, 0, 0])

    if not cfg["isReg"]:
        return sg_loss

    # ---- Pallas: diversity regularizer ------------------------------------------
    TN = min(cfg.get("tn", 2048), N)
    assert N % TN == 0
    GN = N // TN
    div_view = jnp.transpose(aspect_r, (1, 0, 2)).reshape(N, A * D)    # (N, A*D)
    reg_kernel = functools.partial(_div_reg_kernel, num_aspects=A, dim=D,
                                   threshold=cfg["threshold"], eps=1e-8)
    div_blocks = [(TN, A * D), (A * D, A), (8, 128),
                  ((1 + 2 * (A // 2)) * TN, A * D)]   # incl. stacked intermediate
    div_partials = pl.pallas_call(
        reg_kernel,
        out_shape=jax.ShapeDtypeStruct((GN, 8, 128), jnp.float32),
        grid_spec=pltpu.PrefetchScalarGridSpec(
            num_scalar_prefetch=0,
            grid=(GN,),
            in_specs=[pl.BlockSpec((TN, A * D), lambda i: (i, 0)),
                      pl.BlockSpec((A * D, A), lambda i: (0, 0))],
            out_specs=pl.BlockSpec((1, 8, 128), lambda i: (i, 0, 0)),
        ),
        compiler_params=pltpu.CompilerParams(
            dimension_semantics=("parallel",),
            vmem_limit_bytes=_vmem_limit_bytes(*div_blocks)),
    )(div_view, sum_a)
    div_metric = jnp.sum(div_partials[:, 0, 0])

    div_reg = cfg["reg_coef"] * div_metric
    return sg_loss + div_reg, div_reg


# ------------------------------ pure-JAX reference ------------------------------
def asp2vec_reference(params, pairs, negs, offsets, lists, cfg):
    A, N, D = cfg["num_aspects"], cfg["num_nodes"], cfg["dim"]
    aspect_r = params["aspect"].reshape(A, N, D)
    center_w = params["center"]
    B = pairs.shape[0]
    L = lists.shape[0]

    centers = pairs[:, 0]
    contexts = pairs[:, 1]
    ec = center_w[centers]                                             # (B, D)

    t_idx = jnp.arange(L)
    seg = jnp.sum(t_idx[:, None] >= offsets[None, :], axis=1) - 1
    counts = jnp.concatenate([offsets[1:],
                              jnp.array([L], dtype=offsets.dtype)]) - offsets

    def bag_mean(k):
        s = jax.ops.segment_sum(aspect_r[k][lists], seg, num_segments=B)
        return s / jnp.maximum(counts, 1).astype(jnp.float32)[:, None]

    cm = jnp.stack([bag_mean(k) for k in range(A)], axis=1)            # (B, A, D)
    asp_score = jnp.einsum("bad,bd->ba", cm, ec)
    asp_sm = jax.nn.softmax(asp_score, axis=1)

    ce = jnp.transpose(aspect_r[:, contexts, :], (1, 0, 2))            # (B, A, D)
    score_pos = -_log_sigmoid(jnp.einsum("bad,bd->ba", ce, ec))

    ne = aspect_r[:, negs, :]                                          # (A, B, NN, D)
    sn = jnp.einsum("abnd,bd->abn", ne, ec)
    score_neg = jnp.transpose(-jnp.sum(_log_sigmoid(-sn), axis=2))     # (B, A)

    sg_loss = jnp.mean(asp_sm * (score_pos + score_neg))

    if not cfg["isReg"]:
        return sg_loss

    div_metric = jnp.zeros((), jnp.float32)
    norms = jnp.sqrt(jnp.sum(aspect_r * aspect_r, axis=-1))            # (A, N)
    for i in range(A):
        for j in range(i + 1, A):
            dot = jnp.sum(aspect_r[i] * aspect_r[j], axis=-1)
            sim = dot / jnp.maximum(norms[i] * norms[j], 1e-8)
            a = jnp.abs(sim)
            div_metric = div_metric + jnp.sum(jnp.where(a > cfg["threshold"], a, 0.0))
    div_reg = cfg["reg_coef"] * div_metric
    return sg_loss + div_reg, div_reg


# -------------------------------------- main -------------------------------------
if __name__ == "__main__":
    cfg = dict(num_aspects=4, num_nodes=256, dim=32, pooling="mean",
               isSoftmax=True, isNormalSoftmax=True, isGumbelSoftmax=False,
               isReg=True, reg_coef=0.01, threshold=0.3,
               tb=32, tn=256)   # TB = B, TN = N at these shapes -> grid (1, 1)/(1,)
    # TODO(synk): gumbel-softmax branch (stochastic noise) not implemented; this
    # script exercises the deterministic isNormalSoftmax path.

    A, N, D = cfg["num_aspects"], cfg["num_nodes"], cfg["dim"]
    B, NN = 32, 5

    key = jax.random.PRNGKey(0)
    k1, k2, k3, k4, k5 = jax.random.split(key, 5)

    # nn.init.normal_(std=0.01) for both embedding tables (isInit=False path)
    params = {
        "aspect": 0.01 * jax.random.normal(k1, (A * N, D), jnp.float32),
        "center": 0.01 * jax.random.normal(k2, (N, D), jnp.float32),
    }

    pairs = jax.random.randint(k3, (B, 2), 0, N, dtype=jnp.int32)
    negs = jax.random.randint(k4, (B, NN), 0, N, dtype=jnp.int32)

    # ragged bag sizes built host-side (static L, no device sync / recompile churn)
    sizes_np = (1 + (np.arange(B) % 5)).astype(np.int32)
    L = int(sizes_np.sum())
    offsets = jnp.asarray(np.concatenate([[0], np.cumsum(sizes_np)[:-1]]).astype(np.int32))
    lists = jax.random.randint(k5, (L,), 0, N, dtype=jnp.int32)
    batch_idx = 0  # unused by forward(), kept for signature parity

    loss, div_reg = asp2vec_forward(params, pairs, negs, offsets, lists, cfg)
    loss = jax.block_until_ready(loss)
    div_reg = jax.block_until_ready(div_reg)

    loss_ref, div_ref = asp2vec_reference(params, pairs, negs, offsets, lists, cfg)
    np.testing.assert_allclose(np.asarray(loss), np.asarray(loss_ref),
                               rtol=1e-4, atol=1e-5)
    np.testing.assert_allclose(np.asarray(div_reg), np.asarray(div_ref),
                               rtol=1e-4, atol=1e-5)

    print("KERNEL_OK")
</pallas_src>

<mosaic_0001>
module attributes {stable_mosaic.version = 11 : i64} {
  func.func @_sg_loss_kernel(%arg0: i32, %arg1: i32, %arg2: memref<32x128xf32, #tpu.memory_space<vmem>>, %arg3: memref<32x128xf32, #tpu.memory_space<vmem>>, %arg4: memref<128x128xf32, #tpu.memory_space<vmem>>, %arg5: memref<32x128xf32, #tpu.memory_space<vmem>>, %arg6: memref<32x640xf32, #tpu.memory_space<vmem>>, %arg7: memref<128x4xf32, #tpu.memory_space<vmem>>, %arg8: memref<640x20xf32, #tpu.memory_space<vmem>>, %arg9: memref<20x4xf32, #tpu.memory_space<vmem>>, %arg10: memref<1x8x128xf32, #tpu.memory_space<vmem>>, %arg11: memref<32x128xf32, #tpu.memory_space<vmem>>) attributes {dimension_semantics = [#tpu.dimension_semantics<parallel>, #tpu.dimension_semantics<arbitrary>], iteration_bounds = array<i64: 1, 1>, scalar_prefetch = 0 : i64, scratch_operands = 1 : i64, tpu.core_type = #tpu.core_type<tc>, window_params = [{transform_indices = @transform_0, window_bounds = array<i64: 32, 128>}, {transform_indices = @transform_1, window_bounds = array<i64: 32, 128>}, {transform_indices = @transform_2, window_bounds = array<i64: 128, 128>}, {transform_indices = @transform_3, window_bounds = array<i64: 32, 128>}, {transform_indices = @transform_4, window_bounds = array<i64: 32, 640>}, {pipeline_mode = #tpu.pipeline_mode<synchronous>, transform_indices = @transform_5, window_bounds = array<i64: 128, 4>}, {pipeline_mode = #tpu.pipeline_mode<synchronous>, transform_indices = @transform_6, window_bounds = array<i64: 640, 20>}, {pipeline_mode = #tpu.pipeline_mode<synchronous>, transform_indices = @transform_7, window_bounds = array<i64: 20, 4>}, {transform_indices = @transform_8, window_bounds = array<i64: 1, 8, 128>}]} {
    %c0_i32 = arith.constant 0 : i32
    %0 = arith.cmpi eq, %arg1, %c0_i32 : i32
    %1 = arith.extui %0 : i1 to i32
    %c0_i32_0 = arith.constant 0 : i32
    %2 = arith.cmpi ne, %1, %c0_i32_0 : i32
    scf.if %2 {
      %cst_10 = arith.constant 0.000000e+00 : f32
      %12 = vector.broadcast %cst_10 : f32 to vector<32x128xf32>
      %c0_11 = arith.constant 0 : index
      %c0_12 = arith.constant 0 : index
      %13 = vector.load %arg11[%c0_11, %c0_12] : memref<32x128xf32, #tpu.memory_space<vmem>>, vector<32x128xf32>
      tpu.vector_store %arg11[%c0_11, %c0_12], %12 {strides = array<i32>} : memref<32x128xf32, #tpu.memory_space<vmem>>, vector<32x128xf32>,
    } else {
    }
    %c0 = arith.constant 0 : index
    %c0_1 = arith.constant 0 : index
    %3 = vector.load %arg11[%c0, %c0_1] : memref<32x128xf32, #tpu.memory_space<vmem>>, vector<32x128xf32>
    %c0_2 = arith.constant 0 : index
    %c0_3 = arith.constant 0 : index
    %4 = vector.load %arg3[%c0_2, %c0_3] : memref<32x128xf32, #tpu.memory_space<vmem>>, vector<32x128xf32>
    %c0_4 = arith.constant 0 : index
    %c0_5 = arith.constant 0 : index
    %5 = vector.load %arg4[%c0_4, %c0_5] : memref<128x128xf32, #tpu.memory_space<vmem>>, vector<128x128xf32>
    %cst = arith.constant dense<0.000000e+00> : vector<32x128xf32>
    %6 = tpu.matmul %4, %5, %cst {dimension_numbers = #tpu.dot_dimension_numbers<[1], [0], [0], [1], [0, 0, 1, 1], [], []>} : vector<32x128xf32>, vector<128x128xf32>, vector<32x128xf32> -> vector<32x128xf32>
    %7 = arith.addf %3, %6 : vector<32x128xf32>
    %c0_6 = arith.constant 0 : index
    %c0_7 = arith.constant 0 : index
    %8 = vector.load %arg11[%c0_6, %c0_7] : memref<32x128xf32, #tpu.memory_space<vmem>>, vector<32x128xf32>
    tpu.vector_store %arg11[%c0_6, %c0_7], %7 {strides = array<i32>} : memref<32x128xf32, #tpu.memory_space<vmem>>, vector<32x128xf32>,
    %c0_i32_8 = arith.constant 0 : i32
    %9 = arith.cmpi eq, %arg1, %c0_i32_8 : i32
    %10 = arith.extui %9 : i1 to i32
    %c0_i32_9 = arith.constant 0 : i32
    %11 = arith.cmpi ne, %10, %c0_i32_9 : i32
    scf.if %11 {
      %c0_10 = arith.constant 0 : index
      %c0_11 = arith.constant 0 : index
      %12 = vector.load %arg2[%c0_10, %c0_11] : memref<32x128xf32, #tpu.memory_space<vmem>>, vector<32x128xf32>
      %c0_12 = arith.constant 0 : index
      %c0_13 = arith.constant 0 : index
      %13 = vector.load %arg5[%c0_12, %c0_13] : memref<32x128xf32, #tpu.memory_space<vmem>>, vector<32x128xf32>
      %c0_14 = arith.constant 0 : index
      %c0_15 = arith.constant 0 : index
      %14 = vector.load %arg6[%c0_14, %c0_15] : memref<32x640xf32, #tpu.memory_space<vmem>>, vector<32x640xf32>
      %c0_16 = arith.constant 0 : index
      %c0_17 = arith.constant 0 : index
      %15 = vector.load %arg11[%c0_16, %c0_17] : memref<32x128xf32, #tpu.memory_space<vmem>>, vector<32x128xf32>
      %c0_18 = arith.constant 0 : index
      %c0_19 = arith.constant 0 : index
      %16 = vector.load %arg7[%c0_18, %c0_19] : memref<128x4xf32, #tpu.memory_space<vmem>>, vector<128x4xf32>
      %c0_20 = arith.constant 0 : index
      %c0_21 = arith.constant 0 : index
      %17 = vector.load %arg8[%c0_20, %c0_21] : memref<640x20xf32, #tpu.memory_space<vmem>>, vector<640x20xf32>
      %c0_22 = arith.constant 0 : index
      %c0_23 = arith.constant 0 : index
      %18 = vector.load %arg9[%c0_22, %c0_23] : memref<20x4xf32, #tpu.memory_space<vmem>>, vector<20x4xf32>
      %19 = arith.mulf %15, %12 : vector<32x128xf32>
      %20 = arith.mulf %13, %12 : vector<32x128xf32>
      %21 = tpu.concatenate %19, %20 in 0 : vector<32x128xf32>, vector<32x128xf32> -> vector<64x128xf32>
      %cst_24 = arith.constant dense<0.000000e+00> : vector<64x4xf32>
      %22 = tpu.matmul %21, %16, %cst_24 {dimension_numbers = #tpu.dot_dimension_numbers<[1], [0], [0], [1], [0, 0, 1, 1], [], []>} : vector<64x128xf32>, vector<128x4xf32>, vector<64x4xf32> -> vector<64x4xf32>
      %23 = vector.extract_strided_slice %22 {offsets = [0, 0], sizes = [32, 4], strides = [1, 1]} : vector<64x4xf32> to vector<32x4xf32>
      %24 = vector.extract_strided_slice %22 {offsets = [32, 0], sizes = [32, 4], strides = [1, 1]} : vector<64x4xf32> to vector<32x4xf32>
      %25 = tpu.concatenate %12, %12, %12, %12, %12 in 1 : vector<32x128xf32>, vector<32x128xf32>, vector<32x128xf32>, vector<32x128xf32>, vector<32x128xf32> -> vector<32x640xf32>
      %26 = arith.mulf %14, %25 : vector<32x640xf32>
      %cst_25 = arith.constant dense<0.000000e+00> : vector<32x20xf32>
      %27 = tpu.matmul %26, %17, %cst_25 {dimension_numbers = #tpu.dot_dimension_numbers<[1], [0], [0], [1], [0, 0, 1, 1], [], []>} : vector<32x640xf32>, vector<640x20xf32>, vector<32x20xf32> -> vector<32x20xf32>
      %cst_26 = arith.constant 0.000000e+00 : f32
      %28 = vector.broadcast %cst_26 : f32 to vector<32x4xf32>
      %29 = arith.minimumf %24, %28 : vector<32x4xf32>
      %30 = math.absf %24 : vector<32x4xf32>
      %cst_27 = arith.constant 0.000000e+00 : f32
      %31 = vector.broadcast %cst_27 : f32 to vector<32x4xf32>
      %32 = arith.subf %31, %30 : vector<32x4xf32>
      %33 = math.exp %32 : vector<32x4xf32>
      %cst_28 = arith.constant 1.000000e+00 : f32
      %34 = vector.broadcast %cst_28 : f32 to vector<32x4xf32>
      %35 = arith.addf %34, %33 : vector<32x4xf32>
      %36 = math.log %35 : vector<32x4xf32>
      %37 = arith.subf %29, %36 : vector<32x4xf32>
      %cst_29 = arith.constant 0.000000e+00 : f32
      %38 = vector.broadcast %cst_29 : f32 to vector<32x4xf32>
      %39 = arith.subf %38, %37 : vector<32x4xf32>
      %cst_30 = arith.constant 0.000000e+00 : f32
      %40 = vector.broadcast %cst_30 : f32 to vector<32x20xf32>
      %41 = arith.subf %40, %27 : vector<32x20xf32>
      %cst_31 = arith.constant 0.000000e+00 : f32
      %42 = vector.broadcast %cst_31 : f32 to vector<32x20xf32>
      %43 = arith.minimumf %41, %42 : vector<32x20xf32>
      %44 = math.absf %41 : vector<32x20xf32>
      %cst_32 = arith.constant 0.000000e+00 : f32
      %45 = vector.broadcast %cst_32 : f32 to vector<32x20xf32>
      %46 = arith.subf %45, %44 : vector<32x20xf32>
      %47 = math.exp %46 : vector<32x20xf32>
      %cst_33 = arith.constant 1.000000e+00 : f32
      %48 = vector.broadcast %cst_33 : f32 to vector<32x20xf32>
      %49 = arith.addf %48, %47 : vector<32x20xf32>
      %50 = math.log %49 : vector<32x20xf32>
      %51 = arith.subf %43, %50 : vector<32x20xf32>
      %cst_34 = arith.constant 0.000000e+00 : f32
      %52 = vector.broadcast %cst_34 : f32 to vector<32x20xf32>
      %53 = arith.subf %52, %51 : vector<32x20xf32>
      %cst_35 = arith.constant dense<0.000000e+00> : vector<32x4xf32>
      %54 = tpu.matmul %53, %18, %cst_35 {dimension_numbers = #tpu.dot_dimension_numbers<[1], [0], [0], [1], [0, 0, 1, 1], [], []>} : vector<32x20xf32>, vector<20x4xf32>, vector<32x4xf32> -> vector<32x4xf32>
      %cst_36 = arith.constant dense<0xFF800000> : vector<32xf32>
      %55 = vector.multi_reduction <maximumf>, %23, %cst_36 [1] : vector<32x4xf32> to vector<32xf32>
      %56 = vector.shape_cast %55 : vector<32xf32> to vector<32x1xf32>
      %57 = vector.broadcast %56 : vector<32x1xf32> to vector<32x4xf32>
      %58 = arith.subf %23, %57 : vector<32x4xf32>
      %59 = math.exp %58 : vector<32x4xf32>
      %cst_37 = arith.constant dense<0.000000e+00> : vector<32xf32>
      %60 = vector.multi_reduction <add>, %59, %cst_37 [1] : vector<32x4xf32> to vector<32xf32>
      %61 = vector.shape_cast %60 : vector<32xf32> to vector<32x1xf32>
      %62 = tpu.reciprocal %61 {approx = true} : vector<32x1xf32> -> vector<32x1xf32>
      %63 = arith.mulf %61, %62 : vector<32x1xf32>
      %cst_38 = arith.constant 2.000000e+00 : f32
      %64 = vector.broadcast %cst_38 : f32 to vector<32x1xf32>
      %65 = arith.subf %64, %63 : vector<32x1xf32>
      %66 = arith.mulf %62, %65 : vector<32x1xf32>
      %67 = vector.broadcast %66 : vector<32x1xf32> to vector<32x4xf32>
      %68 = arith.mulf %59, %67 : vector<32x4xf32>
      %69 = arith.addf %39, %54 : vector<32x4xf32>
      %70 = arith.mulf %68, %69 : vector<32x4xf32>
      %71 = vector.shape_cast %70 : vector<32x4xf32> to vector<1x32x4xf32>
      %cst_39 = arith.constant dense<0.000000e+00> : vector<1xf32>
      %72 = vector.multi_reduction <add>, %71, %cst_39 [1, 2] : vector<1x32x4xf32> to vector<1xf32>
      %73 = vector.shape_cast %72 : vector<1xf32> to vector<1x1x1xf32>
      %74 = vector.extract %73[0, 0, 0] : f32 from vector<1x1x1xf32>
      %cst_40 = arith.constant 7.812500e-03 : f32
      %75 = arith.mulf %74, %cst_40 : f32
      %76 = vector.broadcast %75 : f32 to vector<1x8x128xf32>
      %c0_41 = arith.constant 0 : index
      %c0_42 = arith.constant 0 : index
      %c0_43 = arith.constant 0 : index
      %77 = vector.load %arg10[%c0_41, %c0_42, %c0_43] : memref<1x8x128xf32, #tpu.memory_space<vmem>>, vector<1x8x128xf32>
      tpu.vector_store %arg10[%c0_41, %c0_42, %c0_43], %76 {strides = array<i32>} : memref<1x8x128xf32, #tpu.memory_space<vmem>>, vector<1x8x128xf32>,
    } else {
    }
    return
  }
  func.func @transform_0(%arg0: i32, %arg1: i32) -> (i32, i32) {
    %c0_i32 = arith.constant 0 : i32
    %c0_i32_0 = arith.constant 0 : i32
    return %arg0, %c0_i32 : i32, i32
  }
  func.func @transform_1(%arg0: i32, %arg1: i32) -> (i32, i32) {
    %c0_i32 = arith.constant 0 : i32
    return %arg0, %arg1 : i32, i32
  }
  func.func @transform_2(%arg0: i32, %arg1: i32) -> (i32, i32) {
    %c0_i32 = arith.constant 0 : i32
    %c0_i32_0 = arith.constant 0 : i32
    return %arg1, %c0_i32 : i32, i32
  }
  func.func @transform_3(%arg0: i32, %arg1: i32) -> (i32, i32) {
    %c0_i32 = arith.constant 0 : i32
    %c0_i32_0 = arith.constant 0 : i32
    return %arg0, %c0_i32 : i32, i32
  }
  func.func @transform_4(%arg0: i32, %arg1: i32) -> (i32, i32) {
    %c0_i32 = arith.constant 0 : i32
    %c0_i32_0 = arith.constant 0 : i32
    return %arg0, %c0_i32 : i32, i32
  }
  func.func @transform_5(%arg0: i32, %arg1: i32) -> (i32, i32) {
    %c0_i32 = arith.constant 0 : i32
    %c0_i32_0 = arith.constant 0 : i32
    %c0_i32_1 = arith.constant 0 : i32
    return %c0_i32, %c0_i32_0 : i32, i32
  }
  func.func @transform_6(%arg0: i32, %arg1: i32) -> (i32, i32) {
    %c0_i32 = arith.constant 0 : i32
    %c0_i32_0 = arith.constant 0 : i32
    %c0_i32_1 = arith.constant 0 : i32
    return %c0_i32, %c0_i32_0 : i32, i32
  }
  func.func @transform_7(%arg0: i32, %arg1: i32) -> (i32, i32) {
    %c0_i32 = arith.constant 0 : i32
    %c0_i32_0 = arith.constant 0 : i32
    %c0_i32_1 = arith.constant 0 : i32
    return %c0_i32, %c0_i32_0 : i32, i32
  }
  func.func @transform_8(%arg0: i32, %arg1: i32) -> (i32, i32, i32) {
    %c0_i32 = arith.constant 0 : i32
    %c0_i32_0 = arith.constant 0 : i32
    %c0_i32_1 = arith.constant 0 : i32
    return %arg0, %c0_i32, %c0_i32_0 : i32, i32, i32
  }
}

</mosaic_0001>

<llo_original>
// kernel: tpu_custom_call.1
$region0: #{tpu_custom_call.1}
  #allocation0 [shape = 'u32[]', space=smem, size = 0x4, offset = 0x4, fixed_abs, tag = 'smem constant byte address 0x4 - core index']
  #allocation1 [shape = 'u32[144,128]{1,0:T(1,128)}', space=vmem, size = 0x12000, scoped, tag = 'internal scratch']
  #allocation2 [shape = 'f32[32,128]{1,0:T(8,128)}', space=vmem, size = 0x4000, scoped, tag = 'scratch operand']
  %s0 = inlined_call_operand.vmem [shape: f32[32,128], index: 0, kind: input, shape index: {}]
  %s1 = inlined_call_operand.vmem [shape: f32[32,128], index: 1, kind: input, shape index: {}]
  %s2 = inlined_call_operand.vmem [shape: f32[128,128], index: 2, kind: input, shape index: {}]
  %s3 = inlined_call_operand.vmem [shape: f32[32,128], index: 3, kind: input, shape index: {}]
  %s4 = inlined_call_operand.vmem [shape: f32[32,640], index: 4, kind: input, shape index: {}]
  %s5 = inlined_call_operand.vmem [shape: f32[128,4], index: 5, kind: input, shape index: {}]
  %s6 = inlined_call_operand.vmem [shape: f32[640,20], index: 6, kind: input, shape index: {}]
  %s7 = inlined_call_operand.vmem [shape: f32[20,4], index: 7, kind: input, shape index: {}]
  %s8 = inlined_call_operand.hbm [shape: f32[1,8,128], index: 8, kind: output, shape index: {}]
  %s9 = sld [smem:[#allocation0]]
  $region50: #{tpu_custom_call.1} parent=0
    _
  %s11 = ssub.s32 1, %s9
  %s12 = scalar_select 0, %s11, %s9
  $region1: #{tpu_custom_call.1} parent=0
    #allocation3 [shape = 'u8[4096]{0}', space=vmem, size = 0x1000, scoped, tag = 'output window, operand 0, single buffered']
    #allocation4 [shape = 's32[1]{0}', space=sflag, size = 0x4, scoped, tag = 'scoped memory for tpu_custom_call.1']
    %13 = vsyncpa [#allocation4], 0
    // Predicated region
    $region2: #{tpu_custom_call.1} parent=1 // pred_check
      _
    $region3: #{tpu_custom_call.1} parent=1 // pred_check_branch
      %15 = sbr.rel (0) target = $region5
    $region4: #{tpu_custom_call.1} parent=1 // pred_region
      _
    $region5: #{tpu_custom_call.1} parent=1 // pred_fallthru
      _
    // Predicated region
    $region6: #{tpu_custom_call.1} parent=1 // pred_check
      _
    $region7: #{tpu_custom_call.1} parent=1 // pred_check_branch
      %17 = sbr.rel (0) target = $region9
    $region8: #{tpu_custom_call.1} parent=1 // pred_region
      _
    $region9: #{tpu_custom_call.1} parent=1 // pred_fallthru
      _
    // Predicated region
    $region10: #{tpu_custom_call.1} parent=1 // pred_check
      _
    $region11: #{tpu_custom_call.1} parent=1 // pred_check_branch
      %19 = sbr.rel (0) target = $region13
    $region12: #{tpu_custom_call.1} parent=1 // pred_region
      _
    $region13: #{tpu_custom_call.1} parent=1 // pred_fallthru
      _
    // Predicated region
    $region14: #{tpu_custom_call.1} parent=1 // pred_check
      _
    $region15: #{tpu_custom_call.1} parent=1 // pred_check_branch
      %21 = sbr.rel (0) target = $region17
    $region16: #{tpu_custom_call.1} parent=1 // pred_region
      _
    $region17: #{tpu_custom_call.1} parent=1 // pred_fallthru
      _
    // Predicated region
    $region18: #{tpu_custom_call.1} parent=1 // pred_check
      _
    $region19: #{tpu_custom_call.1} parent=1 // pred_check_branch
      %23 = sbr.rel (0) target = $region21
    $region20: #{tpu_custom_call.1} parent=1 // pred_region
      _
    $region21: #{tpu_custom_call.1} parent=1 // pred_fallthru
      _
    // Predicated region
    $region22: #{tpu_custom_call.1} parent=1 // pred_check
      _
    $region23: #{tpu_custom_call.1} parent=1 // pred_check_branch
      %25 = sbr.rel (0) target = $region25
    $region24: #{tpu_custom_call.1} parent=1 // pred_region
      _
    $region25: #{tpu_custom_call.1} parent=1 // pred_fallthru
      _
    // Predicated region
    $region26: #{tpu_custom_call.1} parent=1 // pred_check
      _
    $region27: #{tpu_custom_call.1} parent=1 // pred_check_branch
      %27 = sbr.rel (0) target = $region29
    $region28: #{tpu_custom_call.1} parent=1 // pred_region
      _
    $region29: #{tpu_custom_call.1} parent=1 // pred_fallthru
      _
    // Predicated region
    $region30: #{tpu_custom_call.1} parent=1 // pred_check
      _
    $region31: #{tpu_custom_call.1} parent=1 // pred_check_branch
      %29 = sbr.rel (0) target = $region33
    $region32: #{tpu_custom_call.1} parent=1 // pred_region
      _
    $region33: #{tpu_custom_call.1} parent=1 // pred_fallthru
      _
    %p30 = scmp.eq.s32.totalorder 0, 0
    // Predicated region
    $region34: #{tpu_custom_call.1} parent=1 // pred_check
      %p31 = pneg %p30
    $region35: #{tpu_custom_call.1} parent=1 // pred_check_branch
      %33 = sbr.rel (%p31) target = $region37
    $region36: #{tpu_custom_call.1} parent=1 // pred_region
      %34 = vst [vmem:[#allocation2] sm:$0xff] 0.0
      %35 = vst [vmem:[#allocation2 + $0x8] sm:$0xff] 0.0
      %36 = vst [vmem:[#allocation2 + $0x10] sm:$0xff] 0.0
      %37 = vst [vmem:[#allocation2 + $0x18] sm:$0xff] 0.0
    $region37: #{tpu_custom_call.1} parent=1 // pred_fallthru
      _
    %v38 = vld [vmem:[#allocation2] sm:$0xff]
    %v39 = vld [vmem:[#allocation2 + $0x8] sm:$0xff]
    %v40 = vld [vmem:[#allocation2 + $0x10] sm:$0xff]
    %v41 = vld [vmem:[#allocation2 + $0x18] sm:$0xff]
    %v42 = vld [vmem:[%s1] sm:$0xff]
    %v43 = vld [vmem:[%s1 + $0x8] sm:$0xff]
    %v44 = vld [vmem:[%s1 + $0x10] sm:$0xff]
    %v45 = vld [vmem:[%s1 + $0x18] sm:$0xff]
    %v46 = vld [vmem:[%s2] sm:$0xff]
    %v47 = vld [vmem:[%s2 + $0x8] sm:$0xff]
    %v48 = vld [vmem:[%s2 + $0x10] sm:$0xff]
    %v49 = vld [vmem:[%s2 + $0x18] sm:$0xff]
    %v50 = vld [vmem:[%s2 + $0x20] sm:$0xff]
    %v51 = vld [vmem:[%s2 + $0x28] sm:$0xff]
    %v52 = vld [vmem:[%s2 + $0x30] sm:$0xff]
    %v53 = vld [vmem:[%s2 + $0x38] sm:$0xff]
    %v54 = vld [vmem:[%s2 + $0x40] sm:$0xff]
    %v55 = vld [vmem:[%s2 + $0x48] sm:$0xff]
    %v56 = vld [vmem:[%s2 + $0x50] sm:$0xff]
    %v57 = vld [vmem:[%s2 + $0x58] sm:$0xff]
    %v58 = vld [vmem:[%s2 + $0x60] sm:$0xff]
    %v59 = vld [vmem:[%s2 + $0x68] sm:$0xff]
    %v60 = vld [vmem:[%s2 + $0x70] sm:$0xff]
    %v61 = vld [vmem:[%s2 + $0x78] sm:$0xff]
    %62 = vmatprep.subr.mxu0 0.0
    %63 = vmatpush1.msra.mxu0 %v61
    %64 = vmatprep.subr.mxu0 0.0
    %65 = vmatpush1.msra.mxu0 %v60
    %66 = vmatprep.subr.mxu0 0.0
    %67 = vmatpush1.msra.mxu0 %v59
    %68 = vmatprep.subr.mxu0 0.0
    %69 = vmatpush1.msra.mxu0 %v58
    %70 = vmatprep.subr.mxu0 0.0
    %71 = vmatpush1.msra.mxu0 %v57
    %72 = vmatprep.subr.mxu0 0.0
    %73 = vmatpush1.msra.mxu0 %v56
    %74 = vmatprep.subr.mxu0 0.0
    %75 = vmatpush1.msra.mxu0 %v55
    %76 = vmatprep.subr.mxu0 0.0
    %77 = vmatpush1.msra.mxu0 %v54
    %78 = vmatprep.subr.mxu0 0.0
    %79 = vmatpush1.msra.mxu0 %v53
    %80 = vmatprep.subr.mxu0 0.0
    %81 = vmatpush1.msra.mxu0 %v52
    %82 = vmatprep.subr.mxu0 0.0
    %83 = vmatpush1.msra.mxu0 %v51
    %84 = vmatprep.subr.mxu0 0.0
    %85 = vmatpush1.msra.mxu0 %v50
    %86 = vmatprep.subr.mxu0 0.0
    %87 = vmatpush1.msra.mxu0 %v49
    %88 = vmatprep.subr.mxu0 0.0
    %89 = vmatpush1.msra.mxu0 %v48
    %90 = vmatprep.subr.mxu0 0.0
    %91 = vmatpush1.msra.mxu0 %v47
    %92 = vmatprep.subr.mxu0 0.0
    %93 = vmatpush1.msra.mxu0 %v46
    %94 = vmatprep.subr.mxu0 0.0
    %95 = vmatpush2.msra.mxu0 0.0
    %96 = vmatprep.subr.mxu0 0.0
    %97 = vmatpush2.msra.mxu0 0.0
    %98 = vmatprep.subr.mxu0 0.0
    %99 = vmatpush2.msra.mxu0 0.0
    %100 = vmatprep.subr.mxu0 0.0
    %101 = vmatpush2.msra.mxu0 0.0
    %102 = vmatprep.subr.mxu0 0.0
    %103 = vmatpush2.msra.mxu0 0.0
    %104 = vmatprep.subr.mxu0 0.0
    %105 = vmatpush2.msra.mxu0 0.0
    %106 = vmatprep.subr.mxu0 0.0
    %107 = vmatpush2.msra.mxu0 0.0
    %108 = vmatprep.subr.mxu0 0.0
    %109 = vmatpush2.msra.mxu0 0.0
    %110 = vmatprep.subr.mxu0 0.0
    %111 = vmatpush2.msra.mxu0 0.0
    %112 = vmatprep.subr.mxu0 0.0
    %113 = vmatpush2.msra.mxu0 0.0
    %114 = vmatprep.subr.mxu0 0.0
    %115 = vmatpush2.msra.mxu0 0.0
    %116 = vmatprep.subr.mxu0 0.0
    %117 = vmatpush2.msra.mxu0 0.0
    %118 = vmatprep.subr.mxu0 0.0
    %119 = vmatpush2.msra.mxu0 0.0
    %120 = vmatprep.subr.mxu0 0.0
    %121 = vmatpush2.msra.mxu0 0.0
    %122 = vmatprep.subr.mxu0 0.0
    %123 = vmatpush2.msra.mxu0 0.0
    %124 = vmatprep.subr.mxu0 0.0
    %125 = vmatpush2.msra.mxu0 0.0
    %126 = vmatprep.mubr.f32.mxu0 0.0
    %127 = vmatmul.mubr.f32.gmra.mxu0 %v42
    %v128 = vpop.f32.mrf.mxu0
    %v129 = vadd.f32 0.0, %v128
    %v130 = vpop.f32.mrf.mxu0
    %131 = vmatprep.mubr.f32.mxu0 0.0
    %132 = vmatmul.mubr.f32.gmra.mxu0 %v43
    %v133 = vpop.f32.mrf.mxu0
    %v134 = vadd.f32 0.0, %v133
    %v135 = vpop.f32.mrf.mxu0
    %136 = vmatprep.mubr.f32.mxu0 0.0
    %137 = vmatmul.mubr.f32.gmra.mxu0 %v44
    %v138 = vpop.f32.mrf.mxu0
    %v139 = vadd.f32 0.0, %v138
    %v140 = vpop.f32.mrf.mxu0
    %141 = vmatprep.mubr.f32.mxu0 0.0
    %142 = vmatmul.mubr.f32.gmra.mxu0 %v45
    %v143 = vpop.f32.mrf.mxu0
    %v144 = vadd.f32 0.0, %v143
    %v145 = vpop.f32.mrf.mxu0
    %146 = vdwg.mxu0
    %v147 = vadd.f32 %v38, %v129
    %v148 = vadd.f32 %v39, %v134
    %v149 = vadd.f32 %v40, %v139
    %v150 = vadd.f32 %v41, %v144
    %151 = vst [vmem:[#allocation2] sm:$0xff] %v147
    %152 = vst [vmem:[#allocation2 + $0x8] sm:$0xff] %v148
    %153 = vst [vmem:[#allocation2 + $0x10] sm:$0xff] %v149
    %154 = vst [vmem:[#allocation2 + $0x18] sm:$0xff] %v150
    // Predicated region
    $region38: #{tpu_custom_call.1} parent=1 // pred_check
      %p155 = pneg %p30
    $region39: #{tpu_custom_call.1} parent=1 // pred_check_branch
      %157 = sbr.rel (%p155) target = $region41
    $region40: #{tpu_custom_call.1} parent=1 // pred_region
      %v158 = vld [vmem:[%s0] sm:$0xff]
      %v159 = vld [vmem:[%s0 + $0x8] sm:$0xff]
      %v160 = vld [vmem:[%s0 + $0x10] sm:$0xff]
      %v161 = vld [vmem:[%s0 + $0x18] sm:$0xff]
      %v162 = vld [vmem:[%s3] sm:$0xff]
      %v163 = vld [vmem:[%s3 + $0x8] sm:$0xff]
      %v164 = vld [vmem:[%s3 + $0x10] sm:$0xff]
      %v165 = vld [vmem:[%s3 + $0x18] sm:$0xff]
      %v166 = vld [vmem:[%s4] sm:$0xff]
      %v167 = vld [vmem:[%s4 + $0x8] sm:$0xff]
      %v168 = vld [vmem:[%s4 + $0x10] sm:$0xff]
      %v169 = vld [vmem:[%s4 + $0x18] sm:$0xff]
      %v170 = vld [vmem:[%s4 + $0x20] sm:$0xff]
      %v171 = vld [vmem:[%s4 + $0x28] sm:$0xff]
      %v172 = vld [vmem:[%s4 + $0x30] sm:$0xff]
      %v173 = vld [vmem:[%s4 + $0x38] sm:$0xff]
      %v174 = vld [vmem:[%s4 + $0x40] sm:$0xff]
      %v175 = vld [vmem:[%s4 + $0x48] sm:$0xff]
      %v176 = vld [vmem:[%s4 + $0x50] sm:$0xff]
      %v177 = vld [vmem:[%s4 + $0x58] sm:$0xff]
      %v178 = vld [vmem:[%s4 + $0x60] sm:$0xff]
      %v179 = vld [vmem:[%s4 + $0x68] sm:$0xff]
      %v180 = vld [vmem:[%s4 + $0x70] sm:$0xff]
      %v181 = vld [vmem:[%s4 + $0x78] sm:$0xff]
      %v182 = vld [vmem:[%s4 + $0x80] sm:$0xff]
      %v183 = vld [vmem:[%s4 + $0x88] sm:$0xff]
      %v184 = vld [vmem:[%s4 + $0x90] sm:$0xff]
      %v185 = vld [vmem:[%s4 + $0x98] sm:$0xff]
      %v186 = vld [vmem:[#allocation2] sm:$0xff]
      %v187 = vld [vmem:[#allocation2 + $0x8] sm:$0xff]
      %v188 = vld [vmem:[#allocation2 + $0x10] sm:$0xff]
      %v189 = vld [vmem:[#allocation2 + $0x18] sm:$0xff]
      %v190 = vld [vmem:[%s5] sm:$0xff]
      %v191 = vld [vmem:[%s5 + $0x8] sm:$0xff]
      %v192 = vld [vmem:[%s5 + $0x10] sm:$0xff]
      %v193 = vld [vmem:[%s5 + $0x18] sm:$0xff]
      %v194 = vld [vmem:[%s5 + $0x20] sm:$0xff]
      %v195 = vld [vmem:[%s5 + $0x28] sm:$0xff]
      %v196 = vld [vmem:[%s5 + $0x30] sm:$0xff]
      %v197 = vld [vmem:[%s5 + $0x38] sm:$0xff]
      %v198 = vld [vmem:[%s5 + $0x40] sm:$0xff]
      %v199 = vld [vmem:[%s5 + $0x48] sm:$0xff]
      %v200 = vld [vmem:[%s5 + $0x50] sm:$0xff]
      %v201 = vld [vmem:[%s5 + $0x58] sm:$0xff]
      %v202 = vld [vmem:[%s5 + $0x60] sm:$0xff]
      %v203 = vld [vmem:[%s5 + $0x68] sm:$0xff]
      %v204 = vld [vmem:[%s5 + $0x70] sm:$0xff]
      %v205 = vld [vmem:[%s5 + $0x78] sm:$0xff]
      %v206 = vld [vmem:[%s6] sm:$0xff]
      %v207 = vld [vmem:[%s6 + $0x8] sm:$0xff]
      %v208 = vld [vmem:[%s6 + $0x10] sm:$0xff]
      %v209 = vld [vmem:[%s6 + $0x18] sm:$0xff]
      %v210 = vld [vmem:[%s6 + $0x20] sm:$0xff]
      %v211 = vld [vmem:[%s6 + $0x28] sm:$0xff]
      %v212 = vld [vmem:[%s6 + $0x30] sm:$0xff]
      %v213 = vld [vmem:[%s6 + $0x38] sm:$0xff]
      %v214 = vld [vmem:[%s6 + $0x40] sm:$0xff]
      %v215 = vld [vmem:[%s6 + $0x48] sm:$0xff]
      %v216 = vld [vmem:[%s6 + $0x50] sm:$0xff]
      %v217 = vld [vmem:[%s6 + $0x58] sm:$0xff]
      %v218 = vld [vmem:[%s6 + $0x60] sm:$0xff]
      %v219 = vld [vmem:[%s6 + $0x68] sm:$0xff]
      %v220 = vld [vmem:[%s6 + $0x70] sm:$0xff]
      %v221 = vld [vmem:[%s6 + $0x78] sm:$0xff]
      %v222 = vld [vmem:[%s6 + $0x80] sm:$0xff]
      %v223 = vld [vmem:[%s6 + $0x88] sm:$0xff]
      %v224 = vld [vmem:[%s6 + $0x90] sm:$0xff]
      %v225 = vld [vmem:[%s6 + $0x98] sm:$0xff]
      %v226 = vld [vmem:[%s6 + $0xa0] sm:$0xff]
      %v227 = vld [vmem:[%s6 + $0xa8] sm:$0xff]
      %v228 = vld [vmem:[%s6 + $0xb0] sm:$0xff]
      %v229 = vld [vmem:[%s6 + $0xb8] sm:$0xff]
      %v230 = vld [vmem:[%s6 + $0xc0] sm:$0xff]
      %v231 = vld [vmem:[%s6 + $0xc8] sm:$0xff]
      %v232 = vld [vmem:[%s6 + $0xd0] sm:$0xff]
      %v233 = vld [vmem:[%s6 + $0xd8] sm:$0xff]
      %v234 = vld [vmem:[%s6 + $0xe0] sm:$0xff]
      %v235 = vld [vmem:[%s6 + $0xe8] sm:$0xff]
      %v236 = vld [vmem:[%s6 + $0xf0] sm:$0xff]
      %v237 = vld [vmem:[%s6 + $0xf8] sm:$0xff]
      %v238 = vld [vmem:[%s6 + $0x100] sm:$0xff]
      %v239 = vld [vmem:[%s6 + $0x108] sm:$0xff]
      %v240 = vld [vmem:[%s6 + $0x110] sm:$0xff]
      %v241 = vld [vmem:[%s6 + $0x118] sm:$0xff]
      %v242 = vld [vmem:[%s6 + $0x120] sm:$0xff]
      %v243 = vld [vmem:[%s6 + $0x128] sm:$0xff]
      %v244 = vld [vmem:[%s6 + $0x130] sm:$0xff]
      %v245 = vld [vmem:[%s6 + $0x138] sm:$0xff]
      %v246 = vld [vmem:[%s6 + $0x140] sm:$0xff]
      %v247 = vld [vmem:[%s6 + $0x148] sm:$0xff]
      %v248 = vld [vmem:[%s6 + $0x150] sm:$0xff]
      %v249 = vld [vmem:[%s6 + $0x158] sm:$0xff]
      %v250 = vld [vmem:[%s6 + $0x160] sm:$0xff]
      %v251 = vld [vmem:[%s6 + $0x168] sm:$0xff]
      %v252 = vld [vmem:[%s6 + $0x170] sm:$0xff]
      %v253 = vld [vmem:[%s6 + $0x178] sm:$0xff]
      %v254 = vld [vmem:[%s6 + $0x180] sm:$0xff]
      %v255 = vld [vmem:[%s6 + $0x188] sm:$0xff]
      %v256 = vld [vmem:[%s6 + $0x190] sm:$0xff]
      %v257 = vld [vmem:[%s6 + $0x198] sm:$0xff]
      %v258 = vld [vmem:[%s6 + $0x1a0] sm:$0xff]
      %v259 = vld [vmem:[%s6 + $0x1a8] sm:$0xff]
      %v260 = vld [vmem:[%s6 + $0x1b0] sm:$0xff]
      %v261 = vld [vmem:[%s6 + $0x1b8] sm:$0xff]
      %v262 = vld [vmem:[%s6 + $0x1c0] sm:$0xff]
      %v263 = vld [vmem:[%s6 + $0x1c8] sm:$0xff]
      %v264 = vld [vmem:[%s6 + $0x1d0] sm:$0xff]
      %v265 = vld [vmem:[%s6 + $0x1d8] sm:$0xff]
      %v266 = vld [vmem:[%s6 + $0x1e0] sm:$0xff]
      %v267 = vld [vmem:[%s6 + $0x1e8] sm:$0xff]
      %v268 = vld [vmem:[%s6 + $0x1f0] sm:$0xff]
      %v269 = vld [vmem:[%s6 + $0x1f8] sm:$0xff]
      %v270 = vld [vmem:[%s6 + $0x200] sm:$0xff]
      %v271 = vld [vmem:[%s6 + $0x208] sm:$0xff]
      %v272 = vld [vmem:[%s6 + $0x210] sm:$0xff]
      %v273 = vld [vmem:[%s6 + $0x218] sm:$0xff]
      %v274 = vld [vmem:[%s6 + $0x220] sm:$0xff]
      %v275 = vld [vmem:[%s6 + $0x228] sm:$0xff]
      %v276 = vld [vmem:[%s6 + $0x230] sm:$0xff]
      %v277 = vld [vmem:[%s6 + $0x238] sm:$0xff]
      %v278 = vld [vmem:[%s6 + $0x240] sm:$0xff]
      %v279 = vld [vmem:[%s6 + $0x248] sm:$0xff]
      %v280 = vld [vmem:[%s6 + $0x250] sm:$0xff]
      %v281 = vld [vmem:[%s6 + $0x258] sm:$0xff]
      %v282 = vld [vmem:[%s6 + $0x260] sm:$0xff]
      %v283 = vld [vmem:[%s6 + $0x268] sm:$0xff]
      %v284 = vld [vmem:[%s6 + $0x270] sm:$0xff]
      %v285 = vld [vmem:[%s6 + $0x278] sm:$0xff]
      %v286 = vld [vmem:[%s7] sm:$0xff]
      %v287 = vld [vmem:[%s7 + $0x8] sm:$0xff]
      %v288 = vld [vmem:[%s7 + $0x10] sm:$0xf]
      %v289 = vmul.f32 %v186, %v158
      %v290 = vmul.f32 %v187, %v159
      %v291 = vmul.f32 %v188, %v160
      %v292 = vmul.f32 %v189, %v161
      %v293 = vmul.f32 %v162, %v158
      %v294 = vmul.f32 %v163, %v159
      %v295 = vmul.f32 %v164, %v160
      %v296 = vmul.f32 %v165, %v161
      %297 = vmatprep.subr.mxu0 0.0
      %298 = vmatpush1.msra.mxu0 %v205
      %299 = vmatprep.subr.mxu0 0.0
      %300 = vmatpush1.msra.mxu0 %v204
      %301 = vmatprep.subr.mxu0 0.0
      %302 = vmatpush1.msra.mxu0 %v203
      %303 = vmatprep.subr.mxu0 0.0
      %304 = vmatpush1.msra.mxu0 %v202
      %305 = vmatprep.subr.mxu0 0.0
      %306 = vmatpush1.msra.mxu0 %v201
      %307 = vmatprep.subr.mxu0 0.0
      %308 = vmatpush1.msra.mxu0 %v200
      %309 = vmatprep.subr.mxu0 0.0
      %310 = vmatpush1.msra.mxu0 %v199
      %311 = vmatprep.subr.mxu0 0.0
      %312 = vmatpush1.msra.mxu0 %v198
      %313 = vmatprep.subr.mxu0 0.0
      %314 = vmatpush1.msra.mxu0 %v197
      %315 = vmatprep.subr.mxu0 0.0
      %316 = vmatpush1.msra.mxu0 %v196
      %317 = vmatprep.subr.mxu0 0.0
      %318 = vmatpush1.msra.mxu0 %v195
      %319 = vmatprep.subr.mxu0 0.0
      %320 = vmatpush1.msra.mxu0 %v194
      %321 = vmatprep.subr.mxu0 0.0
      %322 = vmatpush1.msra.mxu0 %v193
      %323 = vmatprep.subr.mxu0 0.0
      %324 = vmatpush1.msra.mxu0 %v192
      %325 = vmatprep.subr.mxu0 0.0
      %326 = vmatpush1.msra.mxu0 %v191
      %327 = vmatprep.subr.mxu0 0.0
      %328 = vmatpush1.msra.mxu0 %v190
      %329 = vmatprep.subr.mxu0 0.0
      %330 = vmatpush2.msra.mxu0 0.0
      %331 = vmatprep.subr.mxu0 0.0
      %332 = vmatpush2.msra.mxu0 0.0
      %333 = vmatprep.subr.mxu0 0.0
      %334 = vmatpush2.msra.mxu0 0.0
      %335 = vmatprep.subr.mxu0 0.0
      %336 = vmatpush2.msra.mxu0 0.0
      %337 = vmatprep.subr.mxu0 0.0
      %338 = vmatpush2.msra.mxu0 0.0
      %339 = vmatprep.subr.mxu0 0.0
      %340 = vmatpush2.msra.mxu0 0.0
      %341 = vmatprep.subr.mxu0 0.0
      %342 = vmatpush2.msra.mxu0 0.0
      %343 = vmatprep.subr.mxu0 0.0
      %344 = vmatpush2.msra.mxu0 0.0
      %345 = vmatprep.subr.mxu0 0.0
      %346 = vmatpush2.msra.mxu0 0.0
      %347 = vmatprep.subr.mxu0 0.0
      %348 = vmatpush2.msra.mxu0 0.0
      %349 = vmatprep.subr.mxu0 0.0
      %350 = vmatpush2.msra.mxu0 0.0
      %351 = vmatprep.subr.mxu0 0.0
      %352 = vmatpush2.msra.mxu0 0.0
      %353 = vmatprep.subr.mxu0 0.0
      %354 = vmatpush2.msra.mxu0 0.0
      %355 = vmatprep.subr.mxu0 0.0
      %356 = vmatpush2.msra.mxu0 0.0
      %357 = vmatprep.subr.mxu0 0.0
      %358 = vmatpush2.msra.mxu0 0.0
      %359 = vmatprep.subr.mxu0 0.0
      %360 = vmatpush2.msra.mxu0 0.0
      %361 = vmatprep.mubr.f32.mxu0 0.0
      %362 = vmatmul.mubr.f32.gmra.mxu0 %v289
      %v363 = vpop.f32.mrf.mxu0
      %v364 = vadd.f32 0.0, %v363
      %v365 = vpop.f32.mrf.mxu0
      %366 = vmatprep.mubr.f32.mxu0 0.0
      %367 = vmatmul.mubr.f32.gmra.mxu0 %v290
      %v368 = vpop.f32.mrf.mxu0
      %v369 = vadd.f32 0.0, %v368
      %v370 = vpop.f32.mrf.mxu0
      %371 = vmatprep.mubr.f32.mxu0 0.0
      %372 = vmatmul.mubr.f32.gmra.mxu0 %v291
      %v373 = vpop.f32.mrf.mxu0
      %v374 = vadd.f32 0.0, %v373
      %v375 = vpop.f32.mrf.mxu0
      %376 = vmatprep.mubr.f32.mxu0 0.0
      %377 = vmatmul.mubr.f32.gmra.mxu0 %v292
      %v378 = vpop.f32.mrf.mxu0
      %v379 = vadd.f32 0.0, %v378
      %v380 = vpop.f32.mrf.mxu0
      %381 = vmatprep.mubr.f32.mxu0 0.0
      %382 = vmatmul.mubr.f32.gmra.mxu0 %v293
      %v383 = vpop.f32.mrf.mxu0
      %v384 = vadd.f32 0.0, %v383
      %v385 = vpop.f32.mrf.mxu0
      %386 = vmatprep.mubr.f32.mxu0 0.0
      %387 = vmatmul.mubr.f32.gmra.mxu0 %v294
      %v388 = vpop.f32.mrf.mxu0
      %v389 = vadd.f32 0.0, %v388
      %v390 = vpop.f32.mrf.mxu0
      %391 = vmatprep.mubr.f32.mxu0 0.0
      %392 = vmatmul.mubr.f32.gmra.mxu0 %v295
      %v393 = vpop.f32.mrf.mxu0
      %v394 = vadd.f32 0.0, %v393
      %v395 = vpop.f32.mrf.mxu0
      %396 = vmatprep.mubr.f32.mxu0 0.0
      %397 = vmatmul.mubr.f32.gmra.mxu0 %v296
      %v398 = vpop.f32.mrf.mxu0
      %v399 = vadd.f32 0.0, %v398
      %v400 = vpop.f32.mrf.mxu0
      %401 = vdwg.mxu0
      %v402 = vmul.f32 %v166, %v158
      %v403 = vmul.f32 %v167, %v158
      %v404 = vmul.f32 %v168, %v158
      %v405 = vmul.f32 %v169, %v158
      %v406 = vmul.f32 %v170, %v158
      %v407 = vmul.f32 %v171, %v159
      %v408 = vmul.f32 %v172, %v159
      %v409 = vmul.f32 %v173, %v159
      %v410 = vmul.f32 %v174, %v159
      %v411 = vmul.f32 %v175, %v159
      %v412 = vmul.f32 %v176, %v160
      %v413 = vmul.f32 %v177, %v160
      %v414 = vmul.f32 %v178, %v160
      %v415 = vmul.f32 %v179, %v160
      %v416 = vmul.f32 %v180, %v160
      %v417 = vmul.f32 %v181, %v161
      %v418 = vmul.f32 %v182, %v161
      %v419 = vmul.f32 %v183, %v161
      %v420 = vmul.f32 %v184, %v161
      %v421 = vmul.f32 %v185, %v161
      %422 = vmatprep.subr.mxu0 0.0
      %423 = vmatpush1.msra.mxu0 %v221
      %424 = vmatprep.subr.mxu0 0.0
      %425 = vmatpush1.msra.mxu0 %v220
      %426 = vmatprep.subr.mxu0 0.0
      %427 = vmatpush1.msra.mxu0 %v219
      %428 = vmatprep.subr.mxu0 0.0
      %429 = vmatpush1.msra.mxu0 %v218
      %430 = vmatprep.subr.mxu0 0.0
      %431 = vmatpush1.msra.mxu0 %v217
      %432 = vmatprep.subr.mxu0 0.0
      %433 = vmatpush1.msra.mxu0 %v216
      %434 = vmatprep.subr.mxu0 0.0
      %435 = vmatpush1.msra.mxu0 %v215
      %436 = vmatprep.subr.mxu0 0.0
      %437 = vmatpush1.msra.mxu0 %v214
      %438 = vmatprep.subr.mxu0 0.0
      %439 = vmatpush1.msra.mxu0 %v213
      %440 = vmatprep.subr.mxu0 0.0
      %441 = vmatpush1.msra.mxu0 %v212
      %442 = vmatprep.subr.mxu0 0.0
      %443 = vmatpush1.msra.mxu0 %v211
      %444 = vmatprep.subr.mxu0 0.0
      %445 = vmatpush1.msra.mxu0 %v210
      %446 = vmatprep.subr.mxu0 0.0
      %447 = vmatpush1.msra.mxu0 %v209
      %448 = vmatprep.subr.mxu0 0.0
      %449 = vmatpush1.msra.mxu0 %v208
      %450 = vmatprep.subr.mxu0 0.0
      %451 = vmatpush1.msra.mxu0 %v207
      %452 = vmatprep.subr.mxu0 0.0
      %453 = vmatpush1.msra.mxu0 %v206
      %454 = vmatprep.subr.mxu0 0.0
      %455 = vmatpush2.msra.mxu0 %v237
      %456 = vmatprep.subr.mxu0 0.0
      %457 = vmatpush2.msra.mxu0 %v236
      %458 = vmatprep.subr.mxu0 0.0
      %459 = vmatpush2.msra.mxu0 %v235
      %460 = vmatprep.subr.mxu0 0.0
      %461 = vmatpush2.msra.mxu0 %v234
      %462 = vmatprep.subr.mxu0 0.0
      %463 = vmatpush2.msra.mxu0 %v233
      %464 = vmatprep.subr.mxu0 0.0
      %465 = vmatpush2.msra.mxu0 %v232
      %466 = vmatprep.subr.mxu0 0.0
      %467 = vmatpush2.msra.mxu0 %v231
      %468 = vmatprep.subr.mxu0 0.0
      %469 = vmatpush2.msra.mxu0 %v230
      %470 = vmatprep.subr.mxu0 0.0
      %471 = vmatpush2.msra.mxu0 %v229
      %472 = vmatprep.subr.mxu0 0.0
      %473 = vmatpush2.msra.mxu0 %v228
      %474 = vmatprep.subr.mxu0 0.0
      %475 = vmatpush2.msra.mxu0 %v227
      %476 = vmatprep.subr.mxu0 0.0
      %477 = vmatpush2.msra.mxu0 %v226
      %478 = vmatprep.subr.mxu0 0.0
      %479 = vmatpush2.msra.mxu0 %v225
      %480 = vmatprep.subr.mxu0 0.0
      %481 = vmatpush2.msra.mxu0 %v224
      %482 = vmatprep.subr.mxu0 0.0
      %483 = vmatpush2.msra.mxu0 %v223
      %484 = vmatprep.subr.mxu0 0.0
      %485 = vmatpush2.msra.mxu0 %v222
      %486 = vmatprep.mubr.f32.mxu0 %v403
      %487 = vmatmul.mubr.f32.gmra.mxu0 %v402
      %v488 = vpop.f32.mrf.mxu0
      %v489 = vadd.f32 0.0, %v488
      %v490 = vpop.f32.mrf.mxu0
      %491 = vmatprep.mubr.f32.mxu0 %v408
      %492 = vmatmul.mubr.f32.gmra.mxu0 %v407
      %v493 = vpop.f32.mrf.mxu0
      %v494 = vadd.f32 0.0, %v493
      %v495 = vpop.f32.mrf.mxu0
      %496 = vmatprep.mubr.f32.mxu0 %v413
      %497 = vmatmul.mubr.f32.gmra.mxu0 %v412
      %v498 = vpop.f32.mrf.mxu0
      %v499 = vadd.f32 0.0, %v498
      %v500 = vpop.f32.mrf.mxu0
      %501 = vmatprep.mubr.f32.mxu0 %v418
      %502 = vmatmul.mubr.f32.gmra.mxu0 %v417
      %v503 = vpop.f32.mrf.mxu0
      %v504 = vadd.f32 0.0, %v503
      %v505 = vpop.f32.mrf.mxu0
      %506 = vdwg.mxu0
      %507 = vmatprep.subr.mxu0 0.0
      %508 = vmatpush1.msra.mxu0 %v253
      %509 = vmatprep.subr.mxu0 0.0
      %510 = vmatpush1.msra.mxu0 %v252
      %511 = vmatprep.subr.mxu0 0.0
      %512 = vmatpush1.msra.mxu0 %v251
      %513 = vmatprep.subr.mxu0 0.0
      %514 = vmatpush1.msra.mxu0 %v250
      %515 = vmatprep.subr.mxu0 0.0
      %516 = vmatpush1.msra.mxu0 %v249
      %517 = vmatprep.subr.mxu0 0.0
      %518 = vmatpush1.msra.mxu0 %v248
      %519 = vmatprep.subr.mxu0 0.0
      %520 = vmatpush1.msra.mxu0 %v247
      %521 = vmatprep.subr.mxu0 0.0
      %522 = vmatpush1.msra.mxu0 %v246
      %523 = vmatprep.subr.mxu0 0.0
      %524 = vmatpush1.msra.mxu0 %v245
      %525 = vmatprep.subr.mxu0 0.0
      %526 = vmatpush1.msra.mxu0 %v244
      %527 = vmatprep.subr.mxu0 0.0
      %528 = vmatpush1.msra.mxu0 %v243
      %529 = vmatprep.subr.mxu0 0.0
      %530 = vmatpush1.msra.mxu0 %v242
      %531 = vmatprep.subr.mxu0 0.0
      %532 = vmatpush1.msra.mxu0 %v241
      %533 = vmatprep.subr.mxu0 0.0
      %534 = vmatpush1.msra.mxu0 %v240
      %535 = vmatprep.subr.mxu0 0.0
      %536 = vmatpush1.msra.mxu0 %v239
      %537 = vmatprep.subr.mxu0 0.0
      %538 = vmatpush1.msra.mxu0 %v238
      %539 = vmatprep.subr.mxu0 0.0
      %540 = vmatpush2.msra.mxu0 %v269
      %541 = vmatprep.subr.mxu0 0.0
      %542 = vmatpush2.msra.mxu0 %v268
      %543 = vmatprep.subr.mxu0 0.0
      %544 = vmatpush2.msra.mxu0 %v267
      %545 = vmatprep.subr.mxu0 0.0
      %546 = vmatpush2.msra.mxu0 %v266
      %547 = vmatprep.subr.mxu0 0.0
      %548 = vmatpush2.msra.mxu0 %v265
      %549 = vmatprep.subr.mxu0 0.0
      %550 = vmatpush2.msra.mxu0 %v264
      %551 = vmatprep.subr.mxu0 0.0
      %552 = vmatpush2.msra.mxu0 %v263
      %553 = vmatprep.subr.mxu0 0.0
      %554 = vmatpush2.msra.mxu0 %v262
      %555 = vmatprep.subr.mxu0 0.0
      %556 = vmatpush2.msra.mxu0 %v261
      %557 = vmatprep.subr.mxu0 0.0
      %558 = vmatpush2.msra.mxu0 %v260
      %559 = vmatprep.subr.mxu0 0.0
      %560 = vmatpush2.msra.mxu0 %v259
      %561 = vmatprep.subr.mxu0 0.0
      %562 = vmatpush2.msra.mxu0 %v258
      %563 = vmatprep.subr.mxu0 0.0
      %564 = vmatpush2.msra.mxu0 %v257
      %565 = vmatprep.subr.mxu0 0.0
      %566 = vmatpush2.msra.mxu0 %v256
      %567 = vmatprep.subr.mxu0 0.0
      %568 = vmatpush2.msra.mxu0 %v255
      %569 = vmatprep.subr.mxu0 0.0
      %570 = vmatpush2.msra.mxu0 %v254
      %571 = vmatprep.mubr.f32.mxu0 %v405
      %572 = vmatmul.mubr.f32.gmra.mxu0 %v404
      %v573 = vpop.f32.mrf.mxu0
      %v574 = vadd.f32 %v489, %v573
      %v575 = vpop.f32.mrf.mxu0
      %576 = vmatprep.mubr.f32.mxu0 %v410
      %577 = vmatmul.mubr.f32.gmra.mxu0 %v409
      %v578 = vpop.f32.mrf.mxu0
      %v579 = vadd.f32 %v494, %v578
      %v580 = vpop.f32.mrf.mxu0
      %581 = vmatprep.mubr.f32.mxu0 %v415
      %582 = vmatmul.mubr.f32.gmra.mxu0 %v414
      %v583 = vpop.f32.mrf.mxu0
      %v584 = vadd.f32 %v499, %v583
      %v585 = vpop.f32.mrf.mxu0
      %586 = vmatprep.mubr.f32.mxu0 %v420
      %587 = vmatmul.mubr.f32.gmra.mxu0 %v419
      %v588 = vpop.f32.mrf.mxu0
      %v589 = vadd.f32 %v504, %v588
      %v590 = vpop.f32.mrf.mxu0
      %591 = vdwg.mxu0
      %592 = vmatprep.subr.mxu0 0.0
      %593 = vmatpush1.msra.mxu0 %v285
      %594 = vmatprep.subr.mxu0 0.0
      %595 = vmatpush1.msra.mxu0 %v284
      %596 = vmatprep.subr.mxu0 0.0
      %597 = vmatpush1.msra.mxu0 %v283
      %598 = vmatprep.subr.mxu0 0.0
      %599 = vmatpush1.msra.mxu0 %v282
      %600 = vmatprep.subr.mxu0 0.0
      %601 = vmatpush1.msra.mxu0 %v281
      %602 = vmatprep.subr.mxu0 0.0
      %603 = vmatpush1.msra.mxu0 %v280
      %604 = vmatprep.subr.mxu0 0.0
      %605 = vmatpush1.msra.mxu0 %v279
      %606 = vmatprep.subr.mxu0 0.0
      %607 = vmatpush1.msra.mxu0 %v278
      %608 = vmatprep.subr.mxu0 0.0
      %609 = vmatpush1.msra.mxu0 %v277
      %610 = vmatprep.subr.mxu0 0.0
      %611 = vmatpush1.msra.mxu0 %v276
      %612 = vmatprep.subr.mxu0 0.0
      %613 = vmatpush1.msra.mxu0 %v275
      %614 = vmatprep.subr.mxu0 0.0
      %615 = vmatpush1.msra.mxu0 %v274
      %616 = vmatprep.subr.mxu0 0.0
      %617 = vmatpush1.msra.mxu0 %v273
      %618 = vmatprep.subr.mxu0 0.0
      %619 = vmatpush1.msra.mxu0 %v272
      %620 = vmatprep.subr.mxu0 0.0
      %621 = vmatpush1.msra.mxu0 %v271
      %622 = vmatprep.subr.mxu0 0.0
      %623 = vmatpush1.msra.mxu0 %v270
      %624 = vmatprep.subr.mxu0 0.0
      %625 = vmatpush2.msra.mxu0 0.0
      %626 = vmatprep.subr.mxu0 0.0
      %627 = vmatpush2.msra.mxu0 0.0
      %628 = vmatprep.subr.mxu0 0.0
      %629 = vmatpush2.msra.mxu0 0.0
      %630 = vmatprep.subr.mxu0 0.0
      %631 = vmatpush2.msra.mxu0 0.0
      %632 = vmatprep.subr.mxu0 0.0
      %633 = vmatpush2.msra.mxu0 0.0
      %634 = vmatprep.subr.mxu0 0.0
      %635 = vmatpush2.msra.mxu0 0.0
      %636 = vmatprep.subr.mxu0 0.0
      %637 = vmatpush2.msra.mxu0 0.0
      %638 = vmatprep.subr.mxu0 0.0
      %639 = vmatpush2.msra.mxu0 0.0
      %640 = vmatprep.subr.mxu0 0.0
      %641 = vmatpush2.msra.mxu0 0.0
      %642 = vmatprep.subr.mxu0 0.0
      %643 = vmatpush2.msra.mxu0 0.0
      %644 = vmatprep.subr.mxu0 0.0
      %645 = vmatpush2.msra.mxu0 0.0
      %646 = vmatprep.subr.mxu0 0.0
      %647 = vmatpush2.msra.mxu0 0.0
      %648 = vmatprep.subr.mxu0 0.0
      %649 = vmatpush2.msra.mxu0 0.0
      %650 = vmatprep.subr.mxu0 0.0
      %651 = vmatpush2.msra.mxu0 0.0
      %652 = vmatprep.subr.mxu0 0.0
      %653 = vmatpush2.msra.mxu0 0.0
      %654 = vmatprep.subr.mxu0 0.0
      %655 = vmatpush2.msra.mxu0 0.0
      %656 = vmatprep.mubr.f32.mxu0 0.0
      %657 = vmatmul.mubr.f32.gmra.mxu0 %v406
      %v658 = vpop.f32.mrf.mxu0
      %v659 = vadd.f32 %v574, %v658
      %v660 = vpop.f32.mrf.mxu0
      %661 = vmatprep.mubr.f32.mxu0 0.0
      %662 = vmatmul.mubr.f32.gmra.mxu0 %v411
      %v663 = vpop.f32.mrf.mxu0
      %v664 = vadd.f32 %v579, %v663
      %v665 = vpop.f32.mrf.mxu0
      %666 = vmatprep.mubr.f32.mxu0 0.0
      %667 = vmatmul.mubr.f32.gmra.mxu0 %v416
      %v668 = vpop.f32.mrf.mxu0
      %v669 = vadd.f32 %v584, %v668
      %v670 = vpop.f32.mrf.mxu0
      %671 = vmatprep.mubr.f32.mxu0 0.0
      %672 = vmatmul.mubr.f32.gmra.mxu0 %v421
      %v673 = vpop.f32.mrf.mxu0
      %v674 = vadd.f32 %v589, %v673
      %v675 = vpop.f32.mrf.mxu0
      %676 = vdwg.mxu0
      %v677 = vmin.f32 %v384, 0.0
      %v678 = vmin.f32 %v389, 0.0
      %v679 = vmin.f32 %v394, 0.0
      %v680 = vmin.f32 %v399, 0.0
      %v681 = vand.u32 2147483647, %v384
      %v682 = vand.u32 2147483647, %v389
      %v683 = vand.u32 2147483647, %v394
      %v684 = vand.u32 2147483647, %v399
      %v685 = vsub.f32 0.0, %v681
      %v686 = vsub.f32 0.0, %v682
      %v687 = vsub.f32 0.0, %v683
      %v688 = vsub.f32 0.0, %v684
      %v689 = vmul.f32 %v685, 1.442695
      %v690 = vpow.pop %v689
      %v691 = vmul.f32 %v686, 1.442695
      %v692 = vpow.pop %v691
      %v693 = vmul.f32 %v687, 1.442695
      %v694 = vpow.pop %v693
      %v695 = vmul.f32 %v688, 1.442695
      %v696 = vpow.pop %v695
      %v697 = vadd.f32 %v690, 1.0
      %v698 = vadd.f32 %v692, 1.0
      %v699 = vadd.f32 %v694, 1.0
      %v700 = vadd.f32 %v696, 1.0
      %v701 = vlog2.pop %v697
      %v702 = vmul.f32 %v701, 0.6931472
      %v703 = vlog2.pop %v698
      %v704 = vmul.f32 %v703, 0.6931472
      %v705 = vlog2.pop %v699
      %v706 = vmul.f32 %v705, 0.6931472
      %v707 = vlog2.pop %v700
      %v708 = vmul.f32 %v707, 0.6931472
      %v709 = vsub.f32 %v677, %v702
      %v710 = vsub.f32 %v678, %v704
      %v711 = vsub.f32 %v679, %v706
      %v712 = vsub.f32 %v680, %v708
      %v713 = vsub.f32 0.0, %v709
      %v714 = vsub.f32 0.0, %v710
      %v715 = vsub.f32 0.0, %v711
      %v716 = vsub.f32 0.0, %v712
      %v717 = vsub.f32 0.0, %v659
      %v718 = vsub.f32 0.0, %v664
      %v719 = vsub.f32 0.0, %v669
      %v720 = vsub.f32 0.0, %v674
      %v721 = vmin.f32 %v717, 0.0
      %v722 = vmin.f32 %v718, 0.0
      %v723 = vmin.f32 %v719, 0.0
      %v724 = vmin.f32 %v720, 0.0
      %v725 = vand.u32 2147483647, %v717
      %v726 = vand.u32 2147483647, %v718
      %v727 = vand.u32 2147483647, %v719
      %v728 = vand.u32 2147483647, %v720
      %v729 = vsub.f32 0.0, %v725
      %v730 = vsub.f32 0.0, %v726
      %v731 = vsub.f32 0.0, %v727
      %v732 = vsub.f32 0.0, %v728
      %v733 = vmul.f32 %v729, 1.442695
      %v734 = vpow.pop %v733
      %v735 = vmul.f32 %v730, 1.442695
      %v736 = vpow.pop %v735
      %v737 = vmul.f32 %v731, 1.442695
      %v738 = vpow.pop %v737
      %v739 = vmul.f32 %v732, 1.442695
      %v740 = vpow.pop %v739
      %v741 = vadd.f32 %v734, 1.0
      %v742 = vadd.f32 %v736, 1.0
      %v743 = vadd.f32 %v738, 1.0
      %v744 = vadd.f32 %v740, 1.0
      %v745 = vlog2.pop %v741
      %v746 = vmul.f32 %v745, 0.6931472
      %v747 = vlog2.pop %v742
      %v748 = vmul.f32 %v747, 0.6931472
      %v749 = vlog2.pop %v743
      %v750 = vmul.f32 %v749, 0.6931472
      %v751 = vlog2.pop %v744
      %v752 = vmul.f32 %v751, 0.6931472
      %v753 = vsub.f32 %v721, %v746
      %v754 = vsub.f32 %v722, %v748
      %v755 = vsub.f32 %v723, %v750
      %v756 = vsub.f32 %v724, %v752
      %v757 = vsub.f32 0.0, %v753
      %v758 = vsub.f32 0.0, %v754
      %v759 = vsub.f32 0.0, %v755
      %v760 = vsub.f32 0.0, %v756
      %vm761 = vcmask 162816
      %v763 = vsel %vm761, %v757, 0
      %v766 = vsel %vm761, %v758, 0
      %v769 = vsel %vm761, %v759, 0
      %v772 = vsel %vm761, %v760, 0
      %vm774 = vcmask 1043456
      %v776 = vsel %vm774, %v288, 0
      %778 = vmatprep.subr.mxu0 0.0
      %779 = vmatpush1.msra.mxu0 0.0
      %780 = vmatprep.subr.mxu0 0.0
      %781 = vmatpush1.msra.mxu0 0.0
      %782 = vmatprep.subr.mxu0 0.0
      %783 = vmatpush1.msra.mxu0 0.0
      %784 = vmatprep.subr.mxu0 0.0
      %785 = vmatpush1.msra.mxu0 0.0
      %786 = vmatprep.subr.mxu0 0.0
      %787 = vmatpush1.msra.mxu0 0.0
      %788 = vmatprep.subr.mxu0 0.0
      %789 = vmatpush1.msra.mxu0 0.0
      %790 = vmatprep.subr.mxu0 0.0
      %791 = vmatpush1.msra.mxu0 0.0
      %792 = vmatprep.subr.mxu0 0.0
      %793 = vmatpush1.msra.mxu0 0.0
      %794 = vmatprep.subr.mxu0 0.0
      %795 = vmatpush1.msra.mxu0 0.0
      %796 = vmatprep.subr.mxu0 0.0
      %797 = vmatpush1.msra.mxu0 0.0
      %798 = vmatprep.subr.mxu0 0.0
      %799 = vmatpush1.msra.mxu0 0.0
      %800 = vmatprep.subr.mxu0 0.0
      %801 = vmatpush1.msra.mxu0 0.0
      %802 = vmatprep.subr.mxu0 0.0
      %803 = vmatpush1.msra.mxu0 0.0
      %804 = vmatprep.subr.mxu0 0.0
      %805 = vmatpush1.msra.mxu0 %v776
      %806 = vmatprep.subr.mxu0 0.0
      %807 = vmatpush1.msra.mxu0 %v287
      %808 = vmatprep.subr.mxu0 0.0
      %809 = vmatpush1.msra.mxu0 %v286
      %810 = vmatprep.subr.mxu0 0.0
      %811 = vmatpush2.msra.mxu0 0.0
      %812 = vmatprep.subr.mxu0 0.0
      %813 = vmatpush2.msra.mxu0 0.0
      %814 = vmatprep.subr.mxu0 0.0
      %815 = vmatpush2.msra.mxu0 0.0
      %816 = vmatprep.subr.mxu0 0.0
      %817 = vmatpush2.msra.mxu0 0.0
      %818 = vmatprep.subr.mxu0 0.0
      %819 = vmatpush2.msra.mxu0 0.0
      %820 = vmatprep.subr.mxu0 0.0
      %821 = vmatpush2.msra.mxu0 0.0
      %822 = vmatprep.subr.mxu0 0.0
      %823 = vmatpush2.msra.mxu0 0.0
      %824 = vmatprep.subr.mxu0 0.0
      %825 = vmatpush2.msra.mxu0 0.0
      %826 = vmatprep.subr.mxu0 0.0
      %827 = vmatpush2.msra.mxu0 0.0
      %828 = vmatprep.subr.mxu0 0.0
      %829 = vmatpush2.msra.mxu0 0.0
      %830 = vmatprep.subr.mxu0 0.0
      %831 = vmatpush2.msra.mxu0 0.0
      %832 = vmatprep.subr.mxu0 0.0
      %833 = vmatpush2.msra.mxu0 0.0
      %834 = vmatprep.subr.mxu0 0.0
      %835 = vmatpush2.msra.mxu0 0.0
      %836 = vmatprep.subr.mxu0 0.0
      %837 = vmatpush2.msra.mxu0 0.0
      %838 = vmatprep.subr.mxu0 0.0
      %839 = vmatpush2.msra.mxu0 0.0
      %840 = vmatprep.subr.mxu0 0.0
      %841 = vmatpush2.msra.mxu0 0.0
      %842 = vmatprep.mubr.f32.mxu0 0.0
      %843 = vmatmul.mubr.f32.gmra.mxu0 %v763
      %v844 = vpop.f32.mrf.mxu0
      %v845 = vadd.f32 0.0, %v844
      %v846 = vpop.f32.mrf.mxu0
      %847 = vmatprep.mubr.f32.mxu0 0.0
      %848 = vmatmul.mubr.f32.gmra.mxu0 %v766
      %v849 = vpop.f32.mrf.mxu0
      %v850 = vadd.f32 0.0, %v849
      %v851 = vpop.f32.mrf.mxu0
      %852 = vmatprep.mubr.f32.mxu0 0.0
      %853 = vmatmul.mubr.f32.gmra.mxu0 %v769
      %v854 = vpop.f32.mrf.mxu0
      %v855 = vadd.f32 0.0, %v854
      %v856 = vpop.f32.mrf.mxu0
      %857 = vmatprep.mubr.f32.mxu0 0.0
      %858 = vmatmul.mubr.f32.gmra.mxu0 %v772
      %v859 = vpop.f32.mrf.mxu0
      %v860 = vadd.f32 0.0, %v859
      %v861 = vpop.f32.mrf.mxu0
      %862 = vdwg.mxu0
      %vm863 = vcmask 31744
      %v864 = vsel %vm863, %v364, -inf
      %865 = vmax.xlane.f32.xlu0 %v864
      %v866 = vpop.xlane.xlu0 %865
      %v867 = vsel %vm863, %v369, -inf
      %868 = vmax.xlane.f32.xlu0 %v867
      %v869 = vpop.xlane.xlu0 %868
      %v870 = vsel %vm863, %v374, -inf
      %871 = vmax.xlane.f32.xlu0 %v870
      %v872 = vpop.xlane.xlu0 %871
      %v873 = vsel %vm863, %v379, -inf
      %874 = vmax.xlane.f32.xlu0 %v873
      %v875 = vpop.xlane.xlu0 %874
      %v876 = vsub.f32 %v364, %v866
      %v877 = vsub.f32 %v369, %v869
      %v878 = vsub.f32 %v374, %v872
      %v879 = vsub.f32 %v379, %v875
      %v880 = vmul.f32 %v876, 1.442695
      %v881 = vpow.pop %v880
      %v882 = vmul.f32 %v877, 1.442695
      %v883 = vpow.pop %v882
      %v884 = vmul.f32 %v878, 1.442695
      %v885 = vpow.pop %v884
      %v886 = vmul.f32 %v879, 1.442695
      %v887 = vpow.pop %v886
      %v888 = vsel %vm863, %v881, 0.0
      %889 = vadd.xlane.f32.xlu0 %v888
      %v890 = vpop.xlane.xlu0 %889
      %v891 = vsel %vm863, %v883, 0.0
      %892 = vadd.xlane.f32.xlu0 %v891
      %v893 = vpop.xlane.xlu0 %892
      %v894 = vsel %vm863, %v885, 0.0
      %895 = vadd.xlane.f32.xlu0 %v894
      %v896 = vpop.xlane.xlu0 %895
      %v897 = vsel %vm863, %v887, 0.0
      %898 = vadd.xlane.f32.xlu0 %v897
      %v899 = vpop.xlane.xlu0 %898
      %v900 = vrcp.pop %v890
      %v901 = vrcp.pop %v893
      %v902 = vrcp.pop %v896
      %v903 = vrcp.pop %v899
      %v904 = vmul.f32 %v890, %v900
      %v905 = vmul.f32 %v893, %v901
      %v906 = vmul.f32 %v896, %v902
      %v907 = vmul.f32 %v899, %v903
      %v908 = vsub.f32 2.0, %v904
      %v909 = vsub.f32 2.0, %v905
      %v910 = vsub.f32 2.0, %v906
      %v911 = vsub.f32 2.0, %v907
      %v912 = vmul.f32 %v900, %v908
      %v913 = vmul.f32 %v901, %v909
      %v914 = vmul.f32 %v902, %v910
      %v915 = vmul.f32 %v903, %v911
      %v916 = vmul.f32 %v881, %v912
      %v917 = vmul.f32 %v883, %v913
      %v918 = vmul.f32 %v885, %v914
      %v919 = vmul.f32 %v887, %v915
      %v920 = vadd.f32 %v713, %v845
      %v921 = vadd.f32 %v714, %v850
      %v922 = vadd.f32 %v715, %v855
      %v923 = vadd.f32 %v716, %v860
      %v924 = vmul.f32 %v916, %v920
      %v925 = vmul.f32 %v917, %v921
      %v926 = vmul.f32 %v918, %v922
      %v927 = vmul.f32 %v919, %v923
      %v928 = vsel %vm863, %v924, 0.0
      %v929 = vsel %vm863, %v925, 0.0
      %v930 = vadd.f32 %v928, %v929
      %v931 = vsel %vm863, %v926, 0.0
      %v932 = vadd.f32 %v930, %v931
      %v933 = vsel %vm863, %v927, 0.0
      %v934 = vadd.f32 %v932, %v933
      %935 = vadd.xlane.f32.xlu0 %v934
      %v936 = vpop.xlane.xlu0 %935
      %v937 = vrot.slane %v936, 4
      %v938 = vadd.f32 %v936, %v937
      %v939 = vrot.slane %v938, 2
      %v940 = vadd.f32 %v938, %v939
      %v941 = vrot.slane %v940, 1
      %v942 = vadd.f32 %v940, %v941
      %s943 = vtos %v942
      %s944 = smul.f32 %s943, 0.0078125
      %v945 = vstv %s944
      %946 = vst [vmem:[#allocation3] sm:$0xff] %v945
    $region41: #{tpu_custom_call.1} parent=1 // pred_fallthru
      _
    // Predicated region
    $region42: #{tpu_custom_call.1} parent=1 // pred_check
      _
    $region43: #{tpu_custom_call.1} parent=1 // pred_check_branch
      %948 = sbr.rel (0) target = $region45
    $region44: #{tpu_custom_call.1} parent=1 // pred_region
      %s950 = ssub.s32 128, 128
      %951 = vsyncadd [#allocation4], %s950
      %s953 = sshll.u32 [#allocation3], 4
      %s954 = int_to_ptr.vmem [resolvable:$true] %s953
      %956 = dma.vmem_to_hbm [thread:$0]  %s954, 128, %s8, [#allocation4]
    $region45: #{tpu_custom_call.1} parent=1 // pred_fallthru
      _
    // Predicated region
    $region46: #{tpu_custom_call.1} parent=1 // pred_check
      _
    $region47: #{tpu_custom_call.1} parent=1 // pred_check_branch
      %958 = sbr.rel (0) target = $region49
    $region48: #{tpu_custom_call.1} parent=1 // pred_region
      %959 = dma.done [#allocation4], 128
    $region49: #{tpu_custom_call.1} parent=1 // pred_fallthru
      _
    %960 = vsyncpa [#allocation4], 1

</llo_original>
